<compile_context>
chip_gen: v7x
topology: tpu7x:2x2x1
jax: 0.10.0
libtpu: 0.0.40
codegen_flags: <defaults>
</compile_context>

<pallas_src>
import functools

import numpy as np
import jax
import jax.numpy as jnp
from jax.experimental import pallas as pl
from jax.experimental.pallas import tpu as pltpu


def _round_up(x, m):
    return (x + m - 1) // m * m


def gcn_agg_kernel(a_ref, f_ref, w_ref, b_ref, o_ref, acc_ref, *, relu):
    """One GCN layer, tiled:  acc[i] += A[i,k] @ (F[k] @ W);  finalize: + b (, ReLU).

    Grid = (row blocks of A, col/reduction blocks of A).  Since
    sum_k A[:,k] @ (F[k] @ W) == A @ (F @ W), the feature transform is fused into
    the reduction loop.  All dot operands are bf16; accumulation is f32 on the MXU.
    """
    k = pl.program_id(1)

    @pl.when(k == 0)
    def _():
        acc_ref[...] = jnp.zeros_like(acc_ref)

    fw = jnp.dot(f_ref[...], w_ref[...], preferred_element_type=jnp.float32)
    acc_ref[...] += jnp.dot(a_ref[...], fw.astype(jnp.bfloat16),
                            preferred_element_type=jnp.float32)

    @pl.when(k == pl.num_programs(1) - 1)
    def _():
        r = acc_ref[...] + b_ref[...]
        if relu:
            r = jnp.maximum(r, 0.0)
        o_ref[...] = r.astype(o_ref.dtype)


def _gcn_layer(a_bf16, f_bf16, w_bf16, b_f32, tr, tk, out_dtype, relu):
    """out = act(A @ (F @ W) + b), row-tiled over A; lane-dense output."""
    n_pad = a_bf16.shape[0]
    fdim = f_bf16.shape[1]
    odim = w_bf16.shape[1]
    grid = (n_pad // tr, n_pad // tk)
    return pl.pallas_call(
        functools.partial(gcn_agg_kernel, relu=relu),
        out_shape=jax.ShapeDtypeStruct((n_pad, odim), out_dtype),
        grid_spec=pltpu.PrefetchScalarGridSpec(
            num_scalar_prefetch=0,
            grid=grid,
            in_specs=[
                pl.BlockSpec((tr, tk), lambda i, k: (i, k)),      # A row/col tile
                pl.BlockSpec((tk, fdim), lambda i, k: (k, 0)),    # F rows for block k
                pl.BlockSpec((fdim, odim), lambda i, k: (0, 0)),  # W (resident)
                pl.BlockSpec((1, odim), lambda i, k: (0, 0)),     # bias (resident)
            ],
            out_specs=pl.BlockSpec((tr, odim), lambda i, k: (i, 0)),
            scratch_shapes=[pltpu.VMEM((tr, odim), jnp.float32)],
        ),
        compiler_params=pltpu.CompilerParams(
            # Row axis parallel -> sharded across v7x's 2 TensorCores; reduction
            # axis last + arbitrary (output block resident across it).
            dimension_semantics=("parallel", "arbitrary"),
            # 512-square bf16 A tiles double-buffered + resident operands are
            # ~2-3 MiB: fine on v5e's 16 MiB scoped default, but raise anyway for
            # headroom; still far below v7x's 64 MiB physical VMEM.
            vmem_limit_bytes=32 * 1024 * 1024,
        ),
    )(a_bf16, f_bf16, w_bf16, b_f32)


def build_gcn_adj(edge_index, edge_weight, num_nodes, num_nodes_pad):
    """Dense D^-1/2 (A + I) D^-1/2 (PyG GCNConv semantics, add_self_loops=True),
    scattered directly into a (num_nodes_pad, num_nodes_pad) buffer.  All scatter
    indices are < num_nodes, so padded rows/cols stay exactly zero."""
    src = edge_index[0]
    dst = edge_index[1]
    if edge_weight is None:
        edge_weight = jnp.ones(src.shape[0], jnp.float32)
    loop = jnp.arange(num_nodes, dtype=src.dtype)
    src = jnp.concatenate([src, loop])
    dst = jnp.concatenate([dst, loop])
    w = jnp.concatenate([edge_weight.astype(jnp.float32),
                         jnp.ones(num_nodes, jnp.float32)])
    deg = jnp.zeros(num_nodes, jnp.float32).at[dst].add(w)
    dinv = jnp.where(deg > 0, jax.lax.rsqrt(deg), 0.0)
    norm = dinv[dst] * w * dinv[src]
    return jnp.zeros((num_nodes_pad, num_nodes_pad), jnp.float32).at[dst, src].add(norm)


def revenue_gcn_forward(user, item, edge_index, edge_weight, params):
    wu, bu, wi, bi, w1, b1, w2, b2 = params
    nu, ud = user.shape
    ni, idim = item.shape
    n = nu + ni
    hidden_dim = w1.shape[1]
    output_dim = w2.shape[1]

    # ---- tile-size / padding selection (trace-time Python) ------------------
    # Small graphs: one grid step (the call is overhead-dominated anyway).
    # Large graphs: 512-square A tiles -- big enough to amortize the ~0.35us/step
    # grid overhead and sit near the HBM roofline, small enough to fit the v7x
    # 64 MiB VMEM and the v5e 16 MiB scoped default with double buffering.
    # TODO(synk): per-generation tile table (v5e/v6e 128 MiB VMEM can afford
    # 1024-row A tiles; v7x prefers 512 + relies on the parallel row axis).
    n_pad = _round_up(n, 16)              # 16 = bf16 sublane packing
    if n_pad <= 512:
        tr = tk = n_pad
    else:
        n_pad = _round_up(n, 512)
        tr = tk = 512

    hid_pad = _round_up(hidden_dim, 128)   # lane-dense H store
    out_pad = _round_up(output_dim, 128)   # lane-dense final store

    # ---- fused projection: user_proj / item_proj / concat == part of conv1 ---
    # Indicator columns select the per-type bias row of W_proj, and W_proj is
    # folded into conv1's weight:
    #   conv1(concat(u@Wu+bu, i@Wi+bi)) == A @ (X_aug @ (W_proj @ W1)) + b1.
    k_real = ud + idim + 2
    k_aug = _round_up(k_real, 8)
    x_aug = jnp.zeros((n_pad, k_aug), jnp.float32)
    x_aug = x_aug.at[:nu, :ud].set(user.astype(jnp.float32))
    x_aug = x_aug.at[nu:n, ud:ud + idim].set(item.astype(jnp.float32))
    x_aug = x_aug.at[:nu, ud + idim].set(1.0)        # user rows pick up bu
    x_aug = x_aug.at[nu:n, ud + idim + 1].set(1.0)   # item rows pick up bi
    w_proj = jnp.concatenate([wu, wi, bu, bi], axis=0)          # [k_real, common]
    w1_fused = jnp.zeros((k_aug, hid_pad), jnp.float32)
    w1_fused = w1_fused.at[:k_real, :hidden_dim].set(w_proj @ w1)
    b1_pad = jnp.zeros((1, hid_pad), jnp.float32).at[:, :hidden_dim].set(b1)

    w2_pad = jnp.zeros((hid_pad, out_pad), jnp.float32)
    w2_pad = w2_pad.at[:hidden_dim, :output_dim].set(w2)
    b2_pad = jnp.zeros((1, out_pad), jnp.float32).at[:, :output_dim].set(b2)

    # A_hat built directly at padded shape and cast to bf16 exactly once (the N^2
    # operand dominates bytes; accumulation stays f32 on the MXU).
    a_bf16 = build_gcn_adj(edge_index, edge_weight, n, n_pad).astype(jnp.bfloat16)

    # All matmul operands bf16 (f32 accumulation inside the kernel).
    x_bf16 = x_aug.astype(jnp.bfloat16)
    w1_bf16 = w1_fused.astype(jnp.bfloat16)
    w2_bf16 = w2_pad.astype(jnp.bfloat16)

    # Layer 1: H = ReLU(A @ (X_aug @ W1') + b1).
    # NOTE (padding invariant): padded ROWS of H end up as ReLU(b1) != 0 (A's padded
    # rows are zero, then the bias is added).  This is harmless ONLY because A's
    # padded COLUMNS are zero, so layer 2's aggregation never reads those rows, and
    # padded output rows are sliced off below.  Keep both invariants if the padding
    # or A construction ever changes.
    h_bf16 = _gcn_layer(a_bf16, x_bf16, w1_bf16, b1_pad, tr, tk,
                        jnp.bfloat16, relu=True)

    # Layer 2: out = A @ (H @ W2) + b2 (f32 accumulate, lane-dense 128-wide store).
    out_full = _gcn_layer(a_bf16, h_bf16, w2_bf16, b2_pad, tr, tk,
                          jnp.float32, relu=False)

    return out_full[:n, :output_dim]


def _reference(user, item, edge_index, edge_weight, params):
    """Full-f32 plain-JAX reference matching the PyTorch module semantics."""
    wu, bu, wi, bi, w1, b1, w2, b2 = params
    n = user.shape[0] + item.shape[0]
    a = build_gcn_adj(edge_index, edge_weight, n, n)
    x = jnp.concatenate([user @ wu + bu, item @ wi + bi], axis=0)
    h = jnp.maximum(a @ (x @ w1) + b1, 0.0)
    return a @ (h @ w2) + b2


if __name__ == "__main__":
    # Small, deterministic shapes consistent with the module's forward.
    num_users, num_items = 8, 8
    user_dim, item_dim = 12, 10
    common_dim, hidden_dim, output_dim = 64, 64, 32
    num_nodes = num_users + num_items

    key = jax.random.PRNGKey(0)
    keys = jax.random.split(key, 12)

    user_tensor = jax.random.normal(keys[0], (num_users, user_dim), jnp.float32)
    item_tensor = jax.random.normal(keys[1], (num_items, item_dim), jnp.float32)

    # Bipartite user<->item edges (both directions), deterministic.
    n_edges = 24
    src_u = jax.random.randint(keys[2], (n_edges,), 0, num_users)
    dst_i = jax.random.randint(keys[3], (n_edges,), num_users, num_nodes)
    edge_index = jnp.stack([
        jnp.concatenate([src_u, dst_i]),
        jnp.concatenate([dst_i, src_u]),
    ]).astype(jnp.int32)
    edge_weight = jax.random.uniform(keys[4], (2 * n_edges,), jnp.float32,
                                     minval=0.1, maxval=1.0)

    # Parameters (weights stored as [in_dim, out_dim]; biases as [1, out_dim]).
    def init_linear(k, fan_in, fan_out):
        kw, kb = jax.random.split(k)
        bound = 1.0 / np.sqrt(fan_in)
        w = jax.random.uniform(kw, (fan_in, fan_out), jnp.float32, -bound, bound)
        b = jax.random.uniform(kb, (1, fan_out), jnp.float32, -bound, bound)
        return w, b

    wu, bu = init_linear(keys[5], user_dim, common_dim)     # user_proj
    wi, bi = init_linear(keys[6], item_dim, common_dim)     # item_proj
    w1, b1 = init_linear(keys[7], common_dim, hidden_dim)   # conv1 (GCNConv lin+bias)
    w2, b2 = init_linear(keys[8], hidden_dim, output_dim)   # conv2 (GCNConv lin+bias)
    params = (wu, bu, wi, bi, w1, b1, w2, b2)

    # Jit the whole forward: fuses the adjacency/scatter/pad/cast glue and removes
    # per-op host dispatch (the dominant cost at these toy sizes).
    fwd = jax.jit(revenue_gcn_forward)
    out = jax.block_until_ready(
        fwd(user_tensor, item_tensor, edge_index, edge_weight, params))

    ref = jax.block_until_ready(
        _reference(user_tensor, item_tensor, edge_index, edge_weight, params))
    assert out.shape == (num_nodes, output_dim)
    # bf16 is now used for every matmul operand (A_hat, X_aug, fused W1, W2) with
    # f32 accumulation, so allow a slightly looser tolerance than the pure-f32 ref.
    np.testing.assert_allclose(np.asarray(out), np.asarray(ref),
                               rtol=3e-2, atol=3e-2)
    print("KERNEL_OK")
</pallas_src>

<mosaic_0001>
module attributes {stable_mosaic.version = 11 : i64} {
  func.func private @main(%arg0: i32) attributes {dimension_semantics = [#tpu.dimension_semantics<core_parallel>], iteration_bounds = array<i64: 2>, tpu.core_type = #tpu.core_type<sc_scalar_subcore>, window_params = []} {
    return
  }
}

module attributes {stable_mosaic.version = 11 : i64} {
  func.func private @main(%arg0: i32) attributes {dimension_semantics = [#tpu.dimension_semantics<core_parallel>], iteration_bounds = array<i64: 2>, tpu.core_type = #tpu.core_type<sc_scalar_subcore>, window_params = []} {
    return
  }
}

module attributes {stable_mosaic.version = 11 : i64} {
  func.func @gcn_agg_kernel(%arg0: i32, %arg1: i32, %arg2: memref<16x16xbf16, #tpu.memory_space<vmem>>, %arg3: memref<16x24xbf16, #tpu.memory_space<vmem>>, %arg4: memref<24x128xbf16, #tpu.memory_space<vmem>>, %arg5: memref<1x128xf32, #tpu.memory_space<vmem>>, %arg6: memref<16x128xbf16, #tpu.memory_space<vmem>>, %arg7: memref<16x128xf32, #tpu.memory_space<vmem>>) attributes {dimension_semantics = [#tpu.dimension_semantics<parallel>, #tpu.dimension_semantics<arbitrary>], iteration_bounds = array<i64: 1, 1>, scalar_prefetch = 0 : i64, scratch_operands = 1 : i64, tpu.core_type = #tpu.core_type<tc>, window_params = [{transform_indices = @transform_0, window_bounds = array<i64: 16, 16>}, {transform_indices = @transform_1, window_bounds = array<i64: 16, 24>}, {pipeline_mode = #tpu.pipeline_mode<synchronous>, transform_indices = @transform_2, window_bounds = array<i64: 24, 128>}, {pipeline_mode = #tpu.pipeline_mode<synchronous>, transform_indices = @transform_3, window_bounds = array<i64: 1, 128>}, {transform_indices = @transform_4, window_bounds = array<i64: 16, 128>}]} {
    %c0_i32 = arith.constant 0 : i32
    %0 = arith.cmpi eq, %arg1, %c0_i32 : i32
    %1 = arith.extui %0 : i1 to i32
    %c0_i32_0 = arith.constant 0 : i32
    %2 = arith.cmpi ne, %1, %c0_i32_0 : i32
    scf.if %2 {
      %cst_13 = arith.constant 0.000000e+00 : f32
      %15 = vector.broadcast %cst_13 : f32 to vector<16x128xf32>
      %c0_14 = arith.constant 0 : index
      %c0_15 = arith.constant 0 : index
      %16 = vector.load %arg7[%c0_14, %c0_15] : memref<16x128xf32, #tpu.memory_space<vmem>>, vector<16x128xf32>
      tpu.vector_store %arg7[%c0_14, %c0_15], %15 {strides = array<i32>} : memref<16x128xf32, #tpu.memory_space<vmem>>, vector<16x128xf32>,
    } else {
    }
    %c0 = arith.constant 0 : index
    %c0_1 = arith.constant 0 : index
    %3 = vector.load %arg3[%c0, %c0_1] : memref<16x24xbf16, #tpu.memory_space<vmem>>, vector<16x24xbf16>
    %c0_2 = arith.constant 0 : index
    %c0_3 = arith.constant 0 : index
    %4 = vector.load %arg4[%c0_2, %c0_3] : memref<24x128xbf16, #tpu.memory_space<vmem>>, vector<24x128xbf16>
    %cst = arith.constant dense<0.000000e+00> : vector<16x128xf32>
    %5 = tpu.matmul %3, %4, %cst {dimension_numbers = #tpu.dot_dimension_numbers<[1], [0], [0], [1], [0, 0, 1, 1], [], []>} : vector<16x24xbf16>, vector<24x128xbf16>, vector<16x128xf32> -> vector<16x128xf32>
    %c0_4 = arith.constant 0 : index
    %c0_5 = arith.constant 0 : index
    %6 = vector.load %arg7[%c0_4, %c0_5] : memref<16x128xf32, #tpu.memory_space<vmem>>, vector<16x128xf32>
    %c0_6 = arith.constant 0 : index
    %c0_7 = arith.constant 0 : index
    %7 = vector.load %arg2[%c0_6, %c0_7] : memref<16x16xbf16, #tpu.memory_space<vmem>>, vector<16x16xbf16>
    %8 = arith.truncf %5 : vector<16x128xf32> to vector<16x128xbf16>
    %cst_8 = arith.constant dense<0.000000e+00> : vector<16x128xf32>
    %9 = tpu.matmul %7, %8, %cst_8 {dimension_numbers = #tpu.dot_dimension_numbers<[1], [0], [0], [1], [0, 0, 1, 1], [], []>} : vector<16x16xbf16>, vector<16x128xbf16>, vector<16x128xf32> -> vector<16x128xf32>
    %10 = arith.addf %6, %9 : vector<16x128xf32>
    %c0_9 = arith.constant 0 : index
    %c0_10 = arith.constant 0 : index
    %11 = vector.load %arg7[%c0_9, %c0_10] : memref<16x128xf32, #tpu.memory_space<vmem>>, vector<16x128xf32>
    tpu.vector_store %arg7[%c0_9, %c0_10], %10 {strides = array<i32>} : memref<16x128xf32, #tpu.memory_space<vmem>>, vector<16x128xf32>,
    %c0_i32_11 = arith.constant 0 : i32
    %12 = arith.cmpi eq, %arg1, %c0_i32_11 : i32
    %13 = arith.extui %12 : i1 to i32
    %c0_i32_12 = arith.constant 0 : i32
    %14 = arith.cmpi ne, %13, %c0_i32_12 : i32
    scf.if %14 {
      %c0_13 = arith.constant 0 : index
      %c0_14 = arith.constant 0 : index
      %15 = vector.load %arg7[%c0_13, %c0_14] : memref<16x128xf32, #tpu.memory_space<vmem>>, vector<16x128xf32>
      %c0_15 = arith.constant 0 : index
      %c0_16 = arith.constant 0 : index
      %16 = vector.load %arg5[%c0_15, %c0_16] : memref<1x128xf32, #tpu.memory_space<vmem>>, vector<1x128xf32>
      %17 = vector.broadcast %16 : vector<1x128xf32> to vector<16x128xf32>
      %18 = arith.addf %15, %17 : vector<16x128xf32>
      %cst_17 = arith.constant 0.000000e+00 : f32
      %19 = vector.broadcast %cst_17 : f32 to vector<16x128xf32>
      %20 = arith.maximumf %18, %19 : vector<16x128xf32>
      %21 = arith.truncf %20 : vector<16x128xf32> to vector<16x128xbf16>
      %c0_18 = arith.constant 0 : index
      %c0_19 = arith.constant 0 : index
      %22 = vector.load %arg6[%c0_18, %c0_19] : memref<16x128xbf16, #tpu.memory_space<vmem>>, vector<16x128xbf16>
      tpu.vector_store %arg6[%c0_18, %c0_19], %21 {strides = array<i32>} : memref<16x128xbf16, #tpu.memory_space<vmem>>, vector<16x128xbf16>,
    } else {
    }
    return
  }
  func.func @transform_0(%arg0: i32, %arg1: i32) -> (i32, i32) {
    %c0_i32 = arith.constant 0 : i32
    return %arg0, %arg1 : i32, i32
  }
  func.func @transform_1(%arg0: i32, %arg1: i32) -> (i32, i32) {
    %c0_i32 = arith.constant 0 : i32
    %c0_i32_0 = arith.constant 0 : i32
    return %arg1, %c0_i32 : i32, i32
  }
  func.func @transform_2(%arg0: i32, %arg1: i32) -> (i32, i32) {
    %c0_i32 = arith.constant 0 : i32
    %c0_i32_0 = arith.constant 0 : i32
    %c0_i32_1 = arith.constant 0 : i32
    return %c0_i32, %c0_i32_0 : i32, i32
  }
  func.func @transform_3(%arg0: i32, %arg1: i32) -> (i32, i32) {
    %c0_i32 = arith.constant 0 : i32
    %c0_i32_0 = arith.constant 0 : i32
    %c0_i32_1 = arith.constant 0 : i32
    return %c0_i32, %c0_i32_0 : i32, i32
  }
  func.func @transform_4(%arg0: i32, %arg1: i32) -> (i32, i32) {
    %c0_i32 = arith.constant 0 : i32
    %c0_i32_0 = arith.constant 0 : i32
    return %arg0, %c0_i32 : i32, i32
  }
}

module attributes {stable_mosaic.version = 11 : i64} {
  func.func @gcn_agg_kernel(%arg0: i32, %arg1: i32, %arg2: memref<16x16xbf16, #tpu.memory_space<vmem>>, %arg3: memref<16x128xbf16, #tpu.memory_space<vmem>>, %arg4: memref<128x128xbf16, #tpu.memory_space<vmem>>, %arg5: memref<1x128xf32, #tpu.memory_space<vmem>>, %arg6: memref<16x128xf32, #tpu.memory_space<vmem>>, %arg7: memref<16x128xf32, #tpu.memory_space<vmem>>) attributes {dimension_semantics = [#tpu.dimension_semantics<parallel>, #tpu.dimension_semantics<arbitrary>], iteration_bounds = array<i64: 1, 1>, scalar_prefetch = 0 : i64, scratch_operands = 1 : i64, tpu.core_type = #tpu.core_type<tc>, window_params = [{transform_indices = @transform_0, window_bounds = array<i64: 16, 16>}, {transform_indices = @transform_1, window_bounds = array<i64: 16, 128>}, {pipeline_mode = #tpu.pipeline_mode<synchronous>, transform_indices = @transform_2, window_bounds = array<i64: 128, 128>}, {pipeline_mode = #tpu.pipeline_mode<synchronous>, transform_indices = @transform_3, window_bounds = array<i64: 1, 128>}, {transform_indices = @transform_4, window_bounds = array<i64: 16, 128>}]} {
    %c0_i32 = arith.constant 0 : i32
    %0 = arith.cmpi eq, %arg1, %c0_i32 : i32
    %1 = arith.extui %0 : i1 to i32
    %c0_i32_0 = arith.constant 0 : i32
    %2 = arith.cmpi ne, %1, %c0_i32_0 : i32
    scf.if %2 {
      %cst_13 = arith.constant 0.000000e+00 : f32
      %15 = vector.broadcast %cst_13 : f32 to vector<16x128xf32>
      %c0_14 = arith.constant 0 : index
      %c0_15 = arith.constant 0 : index
      %16 = vector.load %arg7[%c0_14, %c0_15] : memref<16x128xf32, #tpu.memory_space<vmem>>, vector<16x128xf32>
      tpu.vector_store %arg7[%c0_14, %c0_15], %15 {strides = array<i32>} : memref<16x128xf32, #tpu.memory_space<vmem>>, vector<16x128xf32>,
    } else {
    }
    %c0 = arith.constant 0 : index
    %c0_1 = arith.constant 0 : index
    %3 = vector.load %arg3[%c0, %c0_1] : memref<16x128xbf16, #tpu.memory_space<vmem>>, vector<16x128xbf16>
    %c0_2 = arith.constant 0 : index
    %c0_3 = arith.constant 0 : index
    %4 = vector.load %arg4[%c0_2, %c0_3] : memref<128x128xbf16, #tpu.memory_space<vmem>>, vector<128x128xbf16>
    %cst = arith.constant dense<0.000000e+00> : vector<16x128xf32>
    %5 = tpu.matmul %3, %4, %cst {dimension_numbers = #tpu.dot_dimension_numbers<[1], [0], [0], [1], [0, 0, 1, 1], [], []>} : vector<16x128xbf16>, vector<128x128xbf16>, vector<16x128xf32> -> vector<16x128xf32>
    %c0_4 = arith.constant 0 : index
    %c0_5 = arith.constant 0 : index
    %6 = vector.load %arg7[%c0_4, %c0_5] : memref<16x128xf32, #tpu.memory_space<vmem>>, vector<16x128xf32>
    %c0_6 = arith.constant 0 : index
    %c0_7 = arith.constant 0 : index
    %7 = vector.load %arg2[%c0_6, %c0_7] : memref<16x16xbf16, #tpu.memory_space<vmem>>, vector<16x16xbf16>
    %8 = arith.truncf %5 : vector<16x128xf32> to vector<16x128xbf16>
    %cst_8 = arith.constant dense<0.000000e+00> : vector<16x128xf32>
    %9 = tpu.matmul %7, %8, %cst_8 {dimension_numbers = #tpu.dot_dimension_numbers<[1], [0], [0], [1], [0, 0, 1, 1], [], []>} : vector<16x16xbf16>, vector<16x128xbf16>, vector<16x128xf32> -> vector<16x128xf32>
    %10 = arith.addf %6, %9 : vector<16x128xf32>
    %c0_9 = arith.constant 0 : index
    %c0_10 = arith.constant 0 : index
    %11 = vector.load %arg7[%c0_9, %c0_10] : memref<16x128xf32, #tpu.memory_space<vmem>>, vector<16x128xf32>
    tpu.vector_store %arg7[%c0_9, %c0_10], %10 {strides = array<i32>} : memref<16x128xf32, #tpu.memory_space<vmem>>, vector<16x128xf32>,
    %c0_i32_11 = arith.constant 0 : i32
    %12 = arith.cmpi eq, %arg1, %c0_i32_11 : i32
    %13 = arith.extui %12 : i1 to i32
    %c0_i32_12 = arith.constant 0 : i32
    %14 = arith.cmpi ne, %13, %c0_i32_12 : i32
    scf.if %14 {
      %c0_13 = arith.constant 0 : index
      %c0_14 = arith.constant 0 : index
      %15 = vector.load %arg7[%c0_13, %c0_14] : memref<16x128xf32, #tpu.memory_space<vmem>>, vector<16x128xf32>
      %c0_15 = arith.constant 0 : index
      %c0_16 = arith.constant 0 : index
      %16 = vector.load %arg5[%c0_15, %c0_16] : memref<1x128xf32, #tpu.memory_space<vmem>>, vector<1x128xf32>
      %17 = vector.broadcast %16 : vector<1x128xf32> to vector<16x128xf32>
      %18 = arith.addf %15, %17 : vector<16x128xf32>
      %c0_17 = arith.constant 0 : index
      %c0_18 = arith.constant 0 : index
      %19 = vector.load %arg6[%c0_17, %c0_18] : memref<16x128xf32, #tpu.memory_space<vmem>>, vector<16x128xf32>
      tpu.vector_store %arg6[%c0_17, %c0_18], %18 {strides = array<i32>} : memref<16x128xf32, #tpu.memory_space<vmem>>, vector<16x128xf32>,
    } else {
    }
    return
  }
  func.func @transform_0(%arg0: i32, %arg1: i32) -> (i32, i32) {
    %c0_i32 = arith.constant 0 : i32
    return %arg0, %arg1 : i32, i32
  }
  func.func @transform_1(%arg0: i32, %arg1: i32) -> (i32, i32) {
    %c0_i32 = arith.constant 0 : i32
    %c0_i32_0 = arith.constant 0 : i32
    return %arg1, %c0_i32 : i32, i32
  }
  func.func @transform_2(%arg0: i32, %arg1: i32) -> (i32, i32) {
    %c0_i32 = arith.constant 0 : i32
    %c0_i32_0 = arith.constant 0 : i32
    %c0_i32_1 = arith.constant 0 : i32
    return %c0_i32, %c0_i32_0 : i32, i32
  }
  func.func @transform_3(%arg0: i32, %arg1: i32) -> (i32, i32) {
    %c0_i32 = arith.constant 0 : i32
    %c0_i32_0 = arith.constant 0 : i32
    %c0_i32_1 = arith.constant 0 : i32
    return %c0_i32, %c0_i32_0 : i32, i32
  }
  func.func @transform_4(%arg0: i32, %arg1: i32) -> (i32, i32) {
    %c0_i32 = arith.constant 0 : i32
    %c0_i32_0 = arith.constant 0 : i32
    return %arg0, %c0_i32 : i32, i32
  }
}

</mosaic_0001>

<llo_original>
// kernel: revenue_gcn_forward.2
$region0: #{revenue_gcn_forward.2}
  #allocation0 [shape = 'u32[]', space=smem, size = 0x4, offset = 0x4, fixed_abs, tag = 'smem constant byte address 0x4 - core index']
  #allocation1 [shape = 'u32[144,128]{1,0:T(1,128)}', space=vmem, size = 0x12000, scoped, tag = 'internal scratch']
  #allocation2 [shape = 'f32[16,128]{1,0:T(8,128)}', space=vmem, size = 0x2000, scoped, tag = 'scratch operand']
  %s0 = inlined_call_operand.vmem [shape: bf16[16,16], index: 0, kind: input, shape index: {}]
  %s1 = inlined_call_operand.vmem [shape: bf16[16,24], index: 1, kind: input, shape index: {}]
  %s2 = inlined_call_operand.vmem [shape: bf16[24,128], index: 2, kind: input, shape index: {}]
  %s3 = inlined_call_operand.vmem [shape: f32[1,128], index: 3, kind: input, shape index: {}]
  %s4 = inlined_call_operand.vmem [shape: bf16[16,128], index: 4, kind: output, shape index: {}]
  %s5 = sld [smem:[#allocation0]]
  $region34: #{revenue_gcn_forward.2} parent=0
    _
  %s7 = ssub.s32 1, %s5
  %s8 = scalar_select 0, %s7, %s5
  // Predicated region
  $region2: #{revenue_gcn_forward.2} parent=0 // pred_check
    _
  $region3: #{revenue_gcn_forward.2} parent=0 // pred_check_branch
    %10 = sbr.rel (0) target = $region5
  $region4: #{revenue_gcn_forward.2} parent=0 // pred_region
    _
  $region5: #{revenue_gcn_forward.2} parent=0 // pred_fallthru
    _
  // Predicated region
  $region6: #{revenue_gcn_forward.2} parent=0 // pred_check
    _
  $region7: #{revenue_gcn_forward.2} parent=0 // pred_check_branch
    %12 = sbr.rel (0) target = $region9
  $region8: #{revenue_gcn_forward.2} parent=0 // pred_region
    _
  $region9: #{revenue_gcn_forward.2} parent=0 // pred_fallthru
    _
  // Predicated region
  $region10: #{revenue_gcn_forward.2} parent=0 // pred_check
    _
  $region11: #{revenue_gcn_forward.2} parent=0 // pred_check_branch
    %14 = sbr.rel (0) target = $region13
  $region12: #{revenue_gcn_forward.2} parent=0 // pred_region
    _
  $region13: #{revenue_gcn_forward.2} parent=0 // pred_fallthru
    _
  // Predicated region
  $region14: #{revenue_gcn_forward.2} parent=0 // pred_check
    _
  $region15: #{revenue_gcn_forward.2} parent=0 // pred_check_branch
    %16 = sbr.rel (0) target = $region17
  $region16: #{revenue_gcn_forward.2} parent=0 // pred_region
    _
  $region17: #{revenue_gcn_forward.2} parent=0 // pred_fallthru
    _
  %p18 = scmp.eq.s32.totalorder 0, 0
  // Predicated region
  $region18: #{revenue_gcn_forward.2} parent=0 // pred_check
    %p19 = pneg %p18
  $region19: #{revenue_gcn_forward.2} parent=0 // pred_check_branch
    %21 = sbr.rel (%p19) target = $region21
  $region20: #{revenue_gcn_forward.2} parent=0 // pred_region
    %22 = vst [vmem:[#allocation2] sm:$0xff] 0.0
    %23 = vst [vmem:[#allocation2 + $0x8] sm:$0xff] 0.0
  $region21: #{revenue_gcn_forward.2} parent=0 // pred_fallthru
    _
  %v24 = vld [vmem:[%s1] sm:$0xf]
  %v25 = vld [vmem:[%s1 + $0x4] sm:$0xf]
  %v26 = vld [vmem:[%s2] sm:$0xf]
  %v27 = vld [vmem:[%s2 + $0x4] sm:$0xf]
  %v28 = vld [vmem:[%s2 + $0x8] sm:$0xf]
  %v31 = vunpack.c.l.b16 %v24
  %v32 = vunpack.c.l.b16 %v25
  %v33 = vpack.c.b16 %v32, %v31
  %v37 = vunpack.c.l.b16 %v26
  %v38 = vunpack.c.l.b16 %v27
  %v39 = vunpack.c.l.b16 %v28
  %v40 = vpack.c.b16 %v38, %v37
  %v41 = vpack.c.b16 %v39, %v39
  %vm43 = vcmask 195584
  %v45 = vsel %vm43, %v33, 0
  %vm47 = vcmask 1043456
  %v49 = vsel %vm47, %v41, 0
  %51 = vmatprep.subr.bf16.mxu0 0
  %52 = vmatpush1.bf16.msra.mxu0 %v40
  %53 = vmatprep.subr.bf16.mxu0 0
  %54 = vmatpush1.bf16.msra.mxu0 %v49
  %55 = vmatprep.subr.bf16.mxu0 0
  %56 = vmatpush1.bf16.msra.mxu0 0
  %57 = vmatprep.subr.bf16.mxu0 0
  %58 = vmatpush1.bf16.msra.mxu0 0
  %59 = vmatprep.subr.bf16.mxu0 0
  %60 = vmatpush1.bf16.msra.mxu0 0
  %61 = vmatprep.subr.bf16.mxu0 0
  %62 = vmatpush1.bf16.msra.mxu0 0
  %63 = vmatprep.subr.bf16.mxu0 0
  %64 = vmatpush1.bf16.msra.mxu0 0
  %65 = vmatprep.subr.bf16.mxu0 0
  %66 = vmatpush1.bf16.msra.mxu0 0
  %67 = vmatprep.subr.bf16.mxu0 0
  %68 = vmatpush1.bf16.msra.mxu0 0
  %69 = vmatprep.subr.bf16.mxu0 0
  %70 = vmatpush1.bf16.msra.mxu0 0
  %71 = vmatprep.subr.bf16.mxu0 0
  %72 = vmatpush1.bf16.msra.mxu0 0
  %73 = vmatprep.subr.bf16.mxu0 0
  %74 = vmatpush1.bf16.msra.mxu0 0
  %75 = vmatprep.subr.bf16.mxu0 0
  %76 = vmatpush1.bf16.msra.mxu0 0
  %77 = vmatprep.subr.bf16.mxu0 0
  %78 = vmatpush1.bf16.msra.mxu0 0
  %79 = vmatprep.subr.bf16.mxu0 0
  %80 = vmatpush1.bf16.msra.mxu0 0
  %81 = vmatprep.subr.bf16.mxu0 0
  %82 = vmatpush1.bf16.msra.mxu0 0
  %83 = vmatprep.mubr.bf16.mxu0 0
  %84 = vmatmul.mubr.bf16.gmra.mrb[0].mxu0 %v45
  %v85 = vpop.f32.mrb[0].mxu0
  %v86 = vadd.f32 0.0, %v85
  %v87 = vpop.f32.mrb[0].mxu0
  %v88 = vpop.f32.mrb[0].mxu0
  %v89 = vadd.f32 0.0, %v88
  %v90 = vpop.f32.mrb[0].mxu0
  %91 = vdwg.mxu0
  %v92 = vld [vmem:[#allocation2] sm:$0xff]
  %v93 = vld [vmem:[#allocation2 + $0x8] sm:$0xff]
  %v94 = vld [vmem:[%s0] sm:$0xf]
  %v95 = vld [vmem:[%s0 + $0x4] sm:$0xf]
  %v96 = vpack.c.bf16 %v89, %v86
  %v99 = vunpack.c.l.b16 %v94
  %v100 = vunpack.c.l.b16 %v95
  %v101 = vpack.c.b16 %v100, %v99
  %vm102 = vcmask 130048
  %v104 = vsel %vm102, %v101, 0
  %106 = vmatprep.subr.bf16.mxu0 0
  %107 = vmatpush1.bf16.msra.mxu0 %v96
  %108 = vmatprep.subr.bf16.mxu0 0
  %109 = vmatpush1.bf16.msra.mxu0 0
  %110 = vmatprep.subr.bf16.mxu0 0
  %111 = vmatpush1.bf16.msra.mxu0 0
  %112 = vmatprep.subr.bf16.mxu0 0
  %113 = vmatpush1.bf16.msra.mxu0 0
  %114 = vmatprep.subr.bf16.mxu0 0
  %115 = vmatpush1.bf16.msra.mxu0 0
  %116 = vmatprep.subr.bf16.mxu0 0
  %117 = vmatpush1.bf16.msra.mxu0 0
  %118 = vmatprep.subr.bf16.mxu0 0
  %119 = vmatpush1.bf16.msra.mxu0 0
  %120 = vmatprep.subr.bf16.mxu0 0
  %121 = vmatpush1.bf16.msra.mxu0 0
  %122 = vmatprep.subr.bf16.mxu0 0
  %123 = vmatpush1.bf16.msra.mxu0 0
  %124 = vmatprep.subr.bf16.mxu0 0
  %125 = vmatpush1.bf16.msra.mxu0 0
  %126 = vmatprep.subr.bf16.mxu0 0
  %127 = vmatpush1.bf16.msra.mxu0 0
  %128 = vmatprep.subr.bf16.mxu0 0
  %129 = vmatpush1.bf16.msra.mxu0 0
  %130 = vmatprep.subr.bf16.mxu0 0
  %131 = vmatpush1.bf16.msra.mxu0 0
  %132 = vmatprep.subr.bf16.mxu0 0
  %133 = vmatpush1.bf16.msra.mxu0 0
  %134 = vmatprep.subr.bf16.mxu0 0
  %135 = vmatpush1.bf16.msra.mxu0 0
  %136 = vmatprep.subr.bf16.mxu0 0
  %137 = vmatpush1.bf16.msra.mxu0 0
  %138 = vmatprep.mubr.bf16.mxu0 0
  %139 = vmatmul.mubr.bf16.gmra.mrb[0].mxu0 %v104
  %v140 = vpop.f32.mrb[0].mxu0
  %v141 = vadd.f32 0.0, %v140
  %v142 = vpop.f32.mrb[0].mxu0
  %v143 = vpop.f32.mrb[0].mxu0
  %v144 = vadd.f32 0.0, %v143
  %v145 = vpop.f32.mrb[0].mxu0
  %146 = vdwg.mxu0
  %v147 = vadd.f32 %v92, %v141
  %v148 = vadd.f32 %v93, %v144
  %149 = vst [vmem:[#allocation2] sm:$0xff] %v147
  %150 = vst [vmem:[#allocation2 + $0x8] sm:$0xff] %v148
  // Predicated region
  $region22: #{revenue_gcn_forward.2} parent=0 // pred_check
    %p151 = pneg %p18
  $region23: #{revenue_gcn_forward.2} parent=0 // pred_check_branch
    %153 = sbr.rel (%p151) target = $region25
  $region24: #{revenue_gcn_forward.2} parent=0 // pred_region
    %v154 = vld [vmem:[#allocation2] sm:$0xff]
    %v155 = vld [vmem:[#allocation2 + $0x8] sm:$0xff]
    %v156 = vld [vmem:[%s3] sm:$0x1]
    %v158 = vlaneseq
    %v159 = vshrl.u32 %v158, 7
    %v160 = vsub.s32 0, %v159
    %v161 = vrot.slane %v156, %v160
    %v163 = vadd.f32 %v154, %v161
    %v164 = vadd.f32 %v155, %v161
    %v165 = vmax.f32 %v163, 0.0
    %v166 = vmax.f32 %v164, 0.0
    %v167 = vpack.c.bf16 %v166, %v165
    %v169 = vunpack.c.l.b16 %v167
    %v170 = vunpack.c.h.b16 %v167
    %v171 = vpack.c.b16 %v169, %v169
    %v172 = vpack.c.b16 %v170, %v170
    %175 = vst [vmem:[%s4] sm:$0xf] %v171
    %176 = vst [vmem:[%s4 + $0x4] sm:$0xf] %v172
  $region25: #{revenue_gcn_forward.2} parent=0 // pred_fallthru
    _
  // Predicated region
  $region26: #{revenue_gcn_forward.2} parent=0 // pred_check
    _
  $region27: #{revenue_gcn_forward.2} parent=0 // pred_check_branch
    %178 = sbr.rel (0) target = $region29
  $region28: #{revenue_gcn_forward.2} parent=0 // pred_region
    _
  $region29: #{revenue_gcn_forward.2} parent=0 // pred_fallthru
    _
  // Predicated region
  $region30: #{revenue_gcn_forward.2} parent=0 // pred_check
    _
  $region31: #{revenue_gcn_forward.2} parent=0 // pred_check_branch
    %180 = sbr.rel (0) target = $region33
  $region32: #{revenue_gcn_forward.2} parent=0 // pred_region
    _
  $region33: #{revenue_gcn_forward.2} parent=0 // pred_fallthru
    _

// kernel: revenue_gcn_forward.3
$region0: #{revenue_gcn_forward.3}
  #allocation0 [shape = 'u32[]', space=smem, size = 0x4, offset = 0x4, fixed_abs, tag = 'smem constant byte address 0x4 - core index']
  #allocation1 [shape = 'u32[144,128]{1,0:T(1,128)}', space=vmem, size = 0x12000, scoped, tag = 'internal scratch']
  #allocation2 [shape = 'f32[16,128]{1,0:T(8,128)}', space=vmem, size = 0x2000, scoped, tag = 'scratch operand']
  %s0 = inlined_call_operand.vmem [shape: bf16[16,16], index: 0, kind: input, shape index: {}]
  %s1 = inlined_call_operand.vmem [shape: bf16[16,128], index: 1, kind: input, shape index: {}]
  %s2 = inlined_call_operand.vmem [shape: bf16[128,128], index: 2, kind: input, shape index: {}]
  %s3 = inlined_call_operand.vmem [shape: f32[1,128], index: 3, kind: input, shape index: {}]
  %s4 = inlined_call_operand.hbm [shape: f32[16,128], index: 4, kind: output, shape index: {}]
  %s5 = sld [smem:[#allocation0]]
  $region34: #{revenue_gcn_forward.3} parent=0
    _
  %s7 = ssub.s32 1, %s5
  %s8 = scalar_select 0, %s7, %s5
  $region1: #{revenue_gcn_forward.3} parent=0
    #allocation3 [shape = 'u8[8192]{0}', space=vmem, size = 0x2000, scoped, tag = 'output window, operand 0, single buffered']
    #allocation4 [shape = 's32[1]{0}', space=sflag, size = 0x4, scoped, tag = 'scoped memory for revenue_gcn_forward.3']
    %9 = vsyncpa [#allocation4], 0
    // Predicated region
    $region2: #{revenue_gcn_forward.3} parent=1 // pred_check
      _
    $region3: #{revenue_gcn_forward.3} parent=1 // pred_check_branch
      %11 = sbr.rel (0) target = $region5
    $region4: #{revenue_gcn_forward.3} parent=1 // pred_region
      _
    $region5: #{revenue_gcn_forward.3} parent=1 // pred_fallthru
      _
    // Predicated region
    $region6: #{revenue_gcn_forward.3} parent=1 // pred_check
      _
    $region7: #{revenue_gcn_forward.3} parent=1 // pred_check_branch
      %13 = sbr.rel (0) target = $region9
    $region8: #{revenue_gcn_forward.3} parent=1 // pred_region
      _
    $region9: #{revenue_gcn_forward.3} parent=1 // pred_fallthru
      _
    // Predicated region
    $region10: #{revenue_gcn_forward.3} parent=1 // pred_check
      _
    $region11: #{revenue_gcn_forward.3} parent=1 // pred_check_branch
      %15 = sbr.rel (0) target = $region13
    $region12: #{revenue_gcn_forward.3} parent=1 // pred_region
      _
    $region13: #{revenue_gcn_forward.3} parent=1 // pred_fallthru
      _
    // Predicated region
    $region14: #{revenue_gcn_forward.3} parent=1 // pred_check
      _
    $region15: #{revenue_gcn_forward.3} parent=1 // pred_check_branch
      %17 = sbr.rel (0) target = $region17
    $region16: #{revenue_gcn_forward.3} parent=1 // pred_region
      _
    $region17: #{revenue_gcn_forward.3} parent=1 // pred_fallthru
      _
    %p19 = scmp.eq.s32.totalorder 0, 0
    // Predicated region
    $region18: #{revenue_gcn_forward.3} parent=1 // pred_check
      %p20 = pneg %p19
    $region19: #{revenue_gcn_forward.3} parent=1 // pred_check_branch
      %22 = sbr.rel (%p20) target = $region21
    $region20: #{revenue_gcn_forward.3} parent=1 // pred_region
      %23 = vst [vmem:[#allocation2] sm:$0xff] 0.0
      %24 = vst [vmem:[#allocation2 + $0x8] sm:$0xff] 0.0
    $region21: #{revenue_gcn_forward.3} parent=1 // pred_fallthru
      _
    %v25 = vld [vmem:[%s1] sm:$0xf]
    %v26 = vld [vmem:[%s1 + $0x4] sm:$0xf]
    %v27 = vld [vmem:[%s2] sm:$0xf]
    %v28 = vld [vmem:[%s2 + $0x4] sm:$0xf]
    %v29 = vld [vmem:[%s2 + $0x8] sm:$0xf]
    %v30 = vld [vmem:[%s2 + $0xc] sm:$0xf]
    %v31 = vld [vmem:[%s2 + $0x10] sm:$0xf]
    %v32 = vld [vmem:[%s2 + $0x14] sm:$0xf]
    %v33 = vld [vmem:[%s2 + $0x18] sm:$0xf]
    %v34 = vld [vmem:[%s2 + $0x1c] sm:$0xf]
    %v35 = vld [vmem:[%s2 + $0x20] sm:$0xf]
    %v36 = vld [vmem:[%s2 + $0x24] sm:$0xf]
    %v37 = vld [vmem:[%s2 + $0x28] sm:$0xf]
    %v38 = vld [vmem:[%s2 + $0x2c] sm:$0xf]
    %v39 = vld [vmem:[%s2 + $0x30] sm:$0xf]
    %v40 = vld [vmem:[%s2 + $0x34] sm:$0xf]
    %v41 = vld [vmem:[%s2 + $0x38] sm:$0xf]
    %v42 = vld [vmem:[%s2 + $0x3c] sm:$0xf]
    %v45 = vunpack.c.l.b16 %v25
    %v46 = vunpack.c.l.b16 %v26
    %v47 = vpack.c.b16 %v46, %v45
    %v65 = vunpack.c.l.b16 %v27
    %v66 = vunpack.c.l.b16 %v28
    %v67 = vunpack.c.l.b16 %v29
    %v68 = vunpack.c.l.b16 %v30
    %v69 = vunpack.c.l.b16 %v31
    %v70 = vunpack.c.l.b16 %v32
    %v71 = vunpack.c.l.b16 %v33
    %v72 = vunpack.c.l.b16 %v34
    %v73 = vunpack.c.l.b16 %v35
    %v74 = vunpack.c.l.b16 %v36
    %v75 = vunpack.c.l.b16 %v37
    %v76 = vunpack.c.l.b16 %v38
    %v77 = vunpack.c.l.b16 %v39
    %v78 = vunpack.c.l.b16 %v40
    %v79 = vunpack.c.l.b16 %v41
    %v80 = vunpack.c.l.b16 %v42
    %v81 = vpack.c.b16 %v66, %v65
    %v82 = vpack.c.b16 %v68, %v67
    %v83 = vpack.c.b16 %v70, %v69
    %v84 = vpack.c.b16 %v72, %v71
    %v85 = vpack.c.b16 %v74, %v73
    %v86 = vpack.c.b16 %v76, %v75
    %v87 = vpack.c.b16 %v78, %v77
    %v88 = vpack.c.b16 %v80, %v79
    %97 = vmatprep.subr.bf16.mxu0 0
    %98 = vmatpush1.bf16.msra.mxu0 %v81
    %99 = vmatprep.subr.bf16.mxu0 0
    %100 = vmatpush1.bf16.msra.mxu0 %v82
    %101 = vmatprep.subr.bf16.mxu0 0
    %102 = vmatpush1.bf16.msra.mxu0 %v83
    %103 = vmatprep.subr.bf16.mxu0 0
    %104 = vmatpush1.bf16.msra.mxu0 %v84
    %105 = vmatprep.subr.bf16.mxu0 0
    %106 = vmatpush1.bf16.msra.mxu0 %v85
    %107 = vmatprep.subr.bf16.mxu0 0
    %108 = vmatpush1.bf16.msra.mxu0 %v86
    %109 = vmatprep.subr.bf16.mxu0 0
    %110 = vmatpush1.bf16.msra.mxu0 %v87
    %111 = vmatprep.subr.bf16.mxu0 0
    %112 = vmatpush1.bf16.msra.mxu0 %v88
    %113 = vmatprep.subr.bf16.mxu0 0
    %114 = vmatpush1.bf16.msra.mxu0 0
    %115 = vmatprep.subr.bf16.mxu0 0
    %116 = vmatpush1.bf16.msra.mxu0 0
    %117 = vmatprep.subr.bf16.mxu0 0
    %118 = vmatpush1.bf16.msra.mxu0 0
    %119 = vmatprep.subr.bf16.mxu0 0
    %120 = vmatpush1.bf16.msra.mxu0 0
    %121 = vmatprep.subr.bf16.mxu0 0
    %122 = vmatpush1.bf16.msra.mxu0 0
    %123 = vmatprep.subr.bf16.mxu0 0
    %124 = vmatpush1.bf16.msra.mxu0 0
    %125 = vmatprep.subr.bf16.mxu0 0
    %126 = vmatpush1.bf16.msra.mxu0 0
    %127 = vmatprep.subr.bf16.mxu0 0
    %128 = vmatpush1.bf16.msra.mxu0 0
    %129 = vmatprep.mubr.bf16.mxu0 0
    %130 = vmatmul.mubr.bf16.gmra.mrb[0].mxu0 %v47
    %v131 = vpop.f32.mrb[0].mxu0
    %v132 = vadd.f32 0.0, %v131
    %v133 = vpop.f32.mrb[0].mxu0
    %v134 = vpop.f32.mrb[0].mxu0
    %v135 = vadd.f32 0.0, %v134
    %v136 = vpop.f32.mrb[0].mxu0
    %137 = vdwg.mxu0
    %v138 = vld [vmem:[#allocation2] sm:$0xff]
    %v139 = vld [vmem:[#allocation2 + $0x8] sm:$0xff]
    %v140 = vld [vmem:[%s0] sm:$0xf]
    %v141 = vld [vmem:[%s0 + $0x4] sm:$0xf]
    %v142 = vpack.c.bf16 %v135, %v132
    %v145 = vunpack.c.l.b16 %v140
    %v146 = vunpack.c.l.b16 %v141
    %v147 = vpack.c.b16 %v146, %v145
    %vm148 = vcmask 130048
    %v150 = vsel %vm148, %v147, 0
    %152 = vmatprep.subr.bf16.mxu0 0
    %153 = vmatpush1.bf16.msra.mxu0 %v142
    %154 = vmatprep.subr.bf16.mxu0 0
    %155 = vmatpush1.bf16.msra.mxu0 0
    %156 = vmatprep.subr.bf16.mxu0 0
    %157 = vmatpush1.bf16.msra.mxu0 0
    %158 = vmatprep.subr.bf16.mxu0 0
    %159 = vmatpush1.bf16.msra.mxu0 0
    %160 = vmatprep.subr.bf16.mxu0 0
    %161 = vmatpush1.bf16.msra.mxu0 0
    %162 = vmatprep.subr.bf16.mxu0 0
    %163 = vmatpush1.bf16.msra.mxu0 0
    %164 = vmatprep.subr.bf16.mxu0 0
    %165 = vmatpush1.bf16.msra.mxu0 0
    %166 = vmatprep.subr.bf16.mxu0 0
    %167 = vmatpush1.bf16.msra.mxu0 0
    %168 = vmatprep.subr.bf16.mxu0 0
    %169 = vmatpush1.bf16.msra.mxu0 0
    %170 = vmatprep.subr.bf16.mxu0 0
    %171 = vmatpush1.bf16.msra.mxu0 0
    %172 = vmatprep.subr.bf16.mxu0 0
    %173 = vmatpush1.bf16.msra.mxu0 0
    %174 = vmatprep.subr.bf16.mxu0 0
    %175 = vmatpush1.bf16.msra.mxu0 0
    %176 = vmatprep.subr.bf16.mxu0 0
    %177 = vmatpush1.bf16.msra.mxu0 0
    %178 = vmatprep.subr.bf16.mxu0 0
    %179 = vmatpush1.bf16.msra.mxu0 0
    %180 = vmatprep.subr.bf16.mxu0 0
    %181 = vmatpush1.bf16.msra.mxu0 0
    %182 = vmatprep.subr.bf16.mxu0 0
    %183 = vmatpush1.bf16.msra.mxu0 0
    %184 = vmatprep.mubr.bf16.mxu0 0
    %185 = vmatmul.mubr.bf16.gmra.mrb[0].mxu0 %v150
    %v186 = vpop.f32.mrb[0].mxu0
    %v187 = vadd.f32 0.0, %v186
    %v188 = vpop.f32.mrb[0].mxu0
    %v189 = vpop.f32.mrb[0].mxu0
    %v190 = vadd.f32 0.0, %v189
    %v191 = vpop.f32.mrb[0].mxu0
    %192 = vdwg.mxu0
    %v193 = vadd.f32 %v138, %v187
    %v194 = vadd.f32 %v139, %v190
    %195 = vst [vmem:[#allocation2] sm:$0xff] %v193
    %196 = vst [vmem:[#allocation2 + $0x8] sm:$0xff] %v194
    // Predicated region
    $region22: #{revenue_gcn_forward.3} parent=1 // pred_check
      %p197 = pneg %p19
    $region23: #{revenue_gcn_forward.3} parent=1 // pred_check_branch
      %199 = sbr.rel (%p197) target = $region25
    $region24: #{revenue_gcn_forward.3} parent=1 // pred_region
      %v200 = vld [vmem:[#allocation2] sm:$0xff]
      %v201 = vld [vmem:[#allocation2 + $0x8] sm:$0xff]
      %v202 = vld [vmem:[%s3] sm:$0x1]
      %v204 = vlaneseq
      %v205 = vshrl.u32 %v204, 7
      %v206 = vsub.s32 0, %v205
      %v207 = vrot.slane %v202, %v206
      %v209 = vadd.f32 %v200, %v207
      %v210 = vadd.f32 %v201, %v207
      %211 = vst [vmem:[#allocation3] sm:$0xff] %v209
      %212 = vst [vmem:[#allocation3 + $0x8] sm:$0xff] %v210
    $region25: #{revenue_gcn_forward.3} parent=1 // pred_fallthru
      _
    // Predicated region
    $region26: #{revenue_gcn_forward.3} parent=1 // pred_check
      _
    $region27: #{revenue_gcn_forward.3} parent=1 // pred_check_branch
      %214 = sbr.rel (0) target = $region29
    $region28: #{revenue_gcn_forward.3} parent=1 // pred_region
      %s216 = ssub.s32 256, 256
      %217 = vsyncadd [#allocation4], %s216
      %s218 = sshll.u32 [#allocation3], 4
      %s219 = int_to_ptr.vmem [resolvable:$true] %s218
      %224 = dma.vmem_to_hbm [thread:$0]  %s219, 256, %s4, [#allocation4], 128, 128, 8
    $region29: #{revenue_gcn_forward.3} parent=1 // pred_fallthru
      _
    // Predicated region
    $region30: #{revenue_gcn_forward.3} parent=1 // pred_check
      _
    $region31: #{revenue_gcn_forward.3} parent=1 // pred_check_branch
      %226 = sbr.rel (0) target = $region33
    $region32: #{revenue_gcn_forward.3} parent=1 // pred_region
      %227 = dma.done [#allocation4], 256
    $region33: #{revenue_gcn_forward.3} parent=1 // pred_fallthru
      _
    %228 = vsyncpa [#allocation4], 1

</llo_original>
